<compile_context>
chip_gen: v6e
topology: v6e:2x2x1
jax: 0.10.0
libtpu: 0.0.40
codegen_flags: <defaults>
</compile_context>

<pallas_src>
import jax
import jax.numpy as jnp
from jax.experimental import pallas as pl
from jax.experimental.pallas import tpu as pltpu

LANES = 128            # vreg lane width (last dim must be lane-dense)
MAX_TILE_ROWS = 4096   # 4096 x 128 x 4B = 2 MiB per f32 buffer per tile


def _linreg_kernel(w_ref, b_ref, x_ref, o_ref):
    # w_ref, b_ref: (1, 1) f32 scalars in SMEM.
    # x_ref, o_ref: (tile_rows, 128) lane-dense tiles in VMEM (input dtype).
    w = w_ref[0, 0]
    b = b_ref[0, 0]
    # Upcast to f32 for the FMA (v5e has no bf16 VALU path), downcast on store.
    x = x_ref[...].astype(jnp.float32)
    o_ref[...] = (x * w + b).astype(o_ref.dtype)


def _round_up(v, m):
    return ((v + m - 1) // m) * m


@jax.jit
def linear_regression(x, weight, bias):
    """x: (N, 1); weight: (1, 1); bias: (1,) -> (N, 1), same dtype as x."""
    N, F = x.shape
    assert F == 1, "LinearRegression has in_features=1"
    dtype = x.dtype
    itemsize = jnp.dtype(dtype).itemsize

    w = weight.reshape(1, 1).astype(jnp.float32)
    b = bias.reshape(1, 1).astype(jnp.float32)

    # ---- lane-dense repack: (N, 1) -> (rows, 128) slab ---------------------
    # Sublane alignment depends on packing (f32: 8, bf16: 16, int8: 32).
    sublanes = 8 * max(1, 4 // itemsize)
    n_padded = _round_up(N, sublanes * LANES)     # <= sublanes*128-1 extra elems
    rows = n_padded // LANES

    xf = x.reshape(-1)
    if n_padded != N:
        xf = jnp.pad(xf, (0, n_padded - N))       # pad computes w*0+b, discarded
    x2 = xf.reshape(rows, LANES)

    # ---- tile sizing -------------------------------------------------------
    # Big tiles to amortize per-step overhead, but aim for >= ~4 grid steps
    # when the slab allows it (keeps both v7x TensorCores busy). The last grid
    # block may be partial; no rounding of the slab up to a whole tile.
    tile_rows = _round_up(max(pl.cdiv(rows, 4), sublanes), sublanes)
    tile_rows = min(tile_rows, MAX_TILE_ROWS, rows)
    grid = (pl.cdiv(rows, tile_rows),)

    # Double-buffered input + output tiles plus headroom. Worst case (f32,
    # 4096 rows): 2 bufs x 2 arrays x 2 MiB + 4 MiB = 12 MiB -> fits v5e's
    # 16 MiB scoped VMEM and is tiny for v6e/v7x.
    tile_bytes = tile_rows * LANES * itemsize
    vmem_limit = int(2 * 2 * tile_bytes + (4 << 20))

    out2 = pl.pallas_call(
        _linreg_kernel,
        out_shape=jax.ShapeDtypeStruct((rows, LANES), dtype),
        grid=grid,
        in_specs=[
            pl.BlockSpec(memory_space=pltpu.SMEM),          # weight scalar
            pl.BlockSpec(memory_space=pltpu.SMEM),          # bias scalar
            pl.BlockSpec((tile_rows, LANES), lambda i: (i, 0)),
        ],
        out_specs=pl.BlockSpec((tile_rows, LANES), lambda i: (i, 0)),
        compiler_params=pltpu.CompilerParams(
            dimension_semantics=("parallel",),              # shard rows across TCs
            vmem_limit_bytes=vmem_limit,
        ),
    )(w, b, x2)

    # Drop alignment padding (no-op when N was already aligned) and restore
    # the (N, 1) layout of nn.Linear(1, 1).
    out_flat = out2.reshape(-1)
    if n_padded != N:
        out_flat = out_flat[:N]
    return out_flat.reshape(N, 1)


if __name__ == "__main__":
    key = jax.random.PRNGKey(0)
    kx, kw, kb = jax.random.split(key, 3)

    # nn.Linear(1, 1) parameters.
    weight = jax.random.uniform(kw, (1, 1), dtype=jnp.float32, minval=-1.0, maxval=1.0)
    bias = jax.random.uniform(kb, (1,), dtype=jnp.float32, minval=-1.0, maxval=1.0)

    ok = True

    # Small batch, matching the module's (batch, 1) input layout.
    N = 8
    x = jax.random.normal(kx, (N, 1), dtype=jnp.float32)
    out = jax.block_until_ready(linear_regression(x, weight, bias))
    ref = x @ weight.T + bias
    ok &= out.shape == (N, 1)
    ok &= bool(jnp.allclose(out, ref, atol=1e-6))

    # Secondary check: exercises padding, a multi-step grid and a partial
    # final block (rows=40, ~3 grid steps) while staying small.
    N2 = 5000
    x2 = jax.random.normal(kx, (N2, 1), dtype=jnp.float32)
    out2 = jax.block_until_ready(linear_regression(x2, weight, bias))
    ref2 = x2 @ weight.T + bias
    ok &= out2.shape == (N2, 1)
    ok &= bool(jnp.allclose(out2, ref2, atol=1e-6))

    assert ok, "mismatch vs. reference"
    print("KERNEL_OK")
</pallas_src>

<mosaic_0001>
module attributes {stable_mosaic.version = 11 : i64} {
  func.func @_linreg_kernel(%arg0: i32, %arg1: memref<1x1xf32, #tpu.memory_space<smem>>, %arg2: memref<1x1xf32, #tpu.memory_space<smem>>, %arg3: memref<8x128xf32, #tpu.memory_space<vmem>>, %arg4: memref<8x128xf32, #tpu.memory_space<vmem>>) attributes {dimension_semantics = [#tpu.dimension_semantics<parallel>], iteration_bounds = array<i64: 1>, scalar_prefetch = 0 : i64, scratch_operands = 0 : i64, tpu.core_type = #tpu.core_type<tc>, window_params = [{transform_indices = @transform_0, window_bounds = array<i64: 1, 1>}, {transform_indices = @transform_1, window_bounds = array<i64: 1, 1>}, {transform_indices = @transform_2, window_bounds = array<i64: 8, 128>}, {transform_indices = @transform_3, window_bounds = array<i64: 8, 128>}]} {
    %c0 = arith.constant 0 : index
    %c0_0 = arith.constant 0 : index
    %0 = memref.load %arg1[%c0, %c0_0] : memref<1x1xf32, #tpu.memory_space<smem>>
    %c0_1 = arith.constant 0 : index
    %c0_2 = arith.constant 0 : index
    %1 = memref.load %arg2[%c0_1, %c0_2] : memref<1x1xf32, #tpu.memory_space<smem>>
    %c0_3 = arith.constant 0 : index
    %c0_4 = arith.constant 0 : index
    %2 = vector.load %arg3[%c0_3, %c0_4] : memref<8x128xf32, #tpu.memory_space<vmem>>, vector<8x128xf32>
    %3 = vector.broadcast %0 : f32 to vector<8x128xf32>
    %4 = arith.mulf %2, %3 : vector<8x128xf32>
    %5 = vector.broadcast %1 : f32 to vector<8x128xf32>
    %6 = arith.addf %4, %5 : vector<8x128xf32>
    %c0_5 = arith.constant 0 : index
    %c0_6 = arith.constant 0 : index
    %7 = vector.load %arg4[%c0_5, %c0_6] : memref<8x128xf32, #tpu.memory_space<vmem>>, vector<8x128xf32>
    tpu.vector_store %arg4[%c0_5, %c0_6], %6 {strides = array<i32>} : memref<8x128xf32, #tpu.memory_space<vmem>>, vector<8x128xf32>,
    return
  }
  func.func @transform_0(%arg0: i32) -> (i32, i32) {
    %c0_i32 = arith.constant 0 : i32
    %c0_i32_0 = arith.constant 0 : i32
    %c0_i32_1 = arith.constant 0 : i32
    return %c0_i32, %c0_i32_0 : i32, i32
  }
  func.func @transform_1(%arg0: i32) -> (i32, i32) {
    %c0_i32 = arith.constant 0 : i32
    %c0_i32_0 = arith.constant 0 : i32
    %c0_i32_1 = arith.constant 0 : i32
    return %c0_i32, %c0_i32_0 : i32, i32
  }
  func.func @transform_2(%arg0: i32) -> (i32, i32) {
    %c0_i32 = arith.constant 0 : i32
    %c0_i32_0 = arith.constant 0 : i32
    return %arg0, %c0_i32 : i32, i32
  }
  func.func @transform_3(%arg0: i32) -> (i32, i32) {
    %c0_i32 = arith.constant 0 : i32
    %c0_i32_0 = arith.constant 0 : i32
    return %arg0, %c0_i32 : i32, i32
  }
}

</mosaic_0001>

<llo_original>
// kernel: linear_regression.1
$region0: #{linear_regression.1}
  #allocation0 [shape = 'u32[]', space=smem, size = 0x4, offset = 0x4, fixed_abs, tag = 'smem constant byte address 0x4 - core index']
  #allocation1 [shape = 'u32[144,128]{1,0:T(1,128)}', space=vmem, size = 0x12000, scoped, tag = 'internal scratch']
  #allocation2 [shape = 'f32[1,1]{1,0:T(1,128)S(6)}', space=smem, size = 0x200, scoped, tag = 'scoped memory for linear_regression.1']
  #allocation3 [shape = 'f32[1,1]{1,0:T(1,128)S(6)}', space=smem, size = 0x200, scoped, tag = 'scoped memory for linear_regression.1']
  %s0 = inlined_call_operand.<no memory space> [shape: f32[1,1], index: 0, kind: input, shape index: {}]
  %s1 = inlined_call_operand.<no memory space> [shape: f32[1,1], index: 1, kind: input, shape index: {}]
  %s2 = inlined_call_operand.vmem [shape: f32[8,128], index: 2, kind: input, shape index: {}]
  %s3 = inlined_call_operand.vmem [shape: f32[8,128], index: 3, kind: output, shape index: {}]
  %s4 = sld [smem:[#allocation0]]
  $region22: #{linear_regression.1} parent=0
    _
  %s6 = ssub.s32 1, %s4
  %s7 = scalar_select 0, %s6, %s4
  %8 = sst [smem:[#allocation2]] %s0
  %9 = sst [smem:[#allocation3]] %s1
  // Predicated region
  $region2: #{linear_regression.1} parent=0 // pred_check
    _
  $region3: #{linear_regression.1} parent=0 // pred_check_branch
    %11 = sbr.rel (0) target = $region5
  $region4: #{linear_regression.1} parent=0 // pred_region
    _
  $region5: #{linear_regression.1} parent=0 // pred_fallthru
    _
  // Predicated region
  $region6: #{linear_regression.1} parent=0 // pred_check
    _
  $region7: #{linear_regression.1} parent=0 // pred_check_branch
    %13 = sbr.rel (0) target = $region9
  $region8: #{linear_regression.1} parent=0 // pred_region
    _
  $region9: #{linear_regression.1} parent=0 // pred_fallthru
    _
  // Predicated region
  $region10: #{linear_regression.1} parent=0 // pred_check
    _
  $region11: #{linear_regression.1} parent=0 // pred_check_branch
    %15 = sbr.rel (0) target = $region13
  $region12: #{linear_regression.1} parent=0 // pred_region
    _
  $region13: #{linear_regression.1} parent=0 // pred_fallthru
    _
  %s16 = sld [smem:[#allocation2]]
  %s17 = sld [smem:[#allocation3]]
  %v18 = vld [vmem:[%s2] sm:$0xff]
  %v19 = vstv %s16
  %v20 = vmul.f32 %v18, %v19
  %v21 = vstv %s17
  %v22 = vadd.f32 %v20, %v21
  %23 = vst [vmem:[%s3] sm:$0xff] %v22
  // Predicated region
  $region14: #{linear_regression.1} parent=0 // pred_check
    _
  $region15: #{linear_regression.1} parent=0 // pred_check_branch
    %25 = sbr.rel (0) target = $region17
  $region16: #{linear_regression.1} parent=0 // pred_region
    _
  $region17: #{linear_regression.1} parent=0 // pred_fallthru
    _
  // Predicated region
  $region18: #{linear_regression.1} parent=0 // pred_check
    _
  $region19: #{linear_regression.1} parent=0 // pred_check_branch
    %27 = sbr.rel (0) target = $region21
  $region20: #{linear_regression.1} parent=0 // pred_region
    _
  $region21: #{linear_regression.1} parent=0 // pred_fallthru
    _

</llo_original>
